<compile_context>
chip_gen: v7x
topology: tpu7x:2x2x1
jax: 0.10.0
libtpu: 0.0.40
codegen_flags: <defaults>
</compile_context>

<pallas_src>
import functools

import jax
import jax.numpy as jnp
import numpy as np
from jax import lax
from jax.experimental import pallas as pl
from jax.experimental.pallas import tpu as pltpu

BN_EPS = 1e-5
_LANE = 128


def _round_up(x, m):
    return ((x + m - 1) // m) * m


# --------------------------------------------------------------------------
# Pass 1: GEMM tile + per-channel running sum / sum-of-squares accumulators.
# sum_ref / sq_ref use a constant output block index -> resident accumulators.
# --------------------------------------------------------------------------
def _gemm_stats_kernel(p_ref, w_ref, y_ref, sum_ref, sq_ref):
    i = pl.program_id(0)
    y = jnp.dot(p_ref[...], w_ref[...], preferred_element_type=jnp.float32)
    y_ref[...] = y

    @pl.when(i == 0)
    def _():
        sum_ref[...] = jnp.zeros_like(sum_ref)
        sq_ref[...] = jnp.zeros_like(sq_ref)

    sum_ref[...] += jnp.sum(y, axis=0, keepdims=True)
    sq_ref[...] += jnp.sum(y * y, axis=0, keepdims=True)


# --------------------------------------------------------------------------
# Pass 2: folded BatchNorm affine (scale/shift per channel) + ReLU, in place.
# --------------------------------------------------------------------------
def _bn_relu_kernel(y_ref, scale_ref, shift_ref, o_ref):
    o_ref[...] = jnp.maximum(y_ref[...] * scale_ref[...] + shift_ref[...], 0.0)


def _im2col_nhwc(x_nhwc, kh, kw, stride, padding):
    """(N, H, W, C) -> patches (N*OH*OW, KH*KW*C), K ordered (ki, kj, c)."""
    n, h, w, c = x_nhwc.shape
    xp = jnp.pad(x_nhwc, ((0, 0), (padding, padding), (padding, padding), (0, 0)))
    oh = (h + 2 * padding - kh) // stride + 1
    ow = (w + 2 * padding - kw) // stride + 1
    cols = []
    for ki in range(kh):
        for kj in range(kw):
            sl = xp[:, ki:ki + (oh - 1) * stride + 1:stride,
                    kj:kj + (ow - 1) * stride + 1:stride, :]        # (N, OH, OW, C)
            cols.append(sl)
    patches = jnp.stack(cols, axis=3).reshape(n * oh * ow, kh * kw * c)
    return patches, oh, ow


def _choose_tm(m, k_pad, cout_pad, budget_bytes=20 << 20):
    """Largest M-tile (multiple of 128) whose double-buffered streams fit the
    VMEM budget (conservative enough for v7x's 64 MiB as well as v5e/v6e)."""
    resident = 2 * k_pad * cout_pad * 2                 # bf16 weight block (x2 slack)
    per_row = 2 * k_pad * 2 + 2 * cout_pad * 4          # dbl-buffered patches + y
    tm = (budget_bytes - resident) // max(per_row, 1)
    tm = int(max(_LANE, min(1024, tm)))
    tm -= tm % _LANE
    return min(tm, _round_up(m, _LANE))


@functools.partial(jax.jit, static_argnames=("stride", "padding"))
def conv2d_module_forward(x, weight, bias, gamma, beta, *, stride=1, padding=0):
    """Conv2d(+bias) -> BatchNorm2d(train) -> ReLU.

    x: (N, Cin, H, W) f32, weight: (Cout, Cin, KH, KW) f32 (PyTorch layout),
    bias/gamma/beta: (Cout,).  Returns (N, Cout, OH, OW) f32.
    """
    # Conv bias is exactly cancelled by the BatchNorm mean subtraction, so it
    # never needs to be added (zero effect on the module output).
    del bias

    n, cin, h, w = x.shape
    cout, _, kh, kw = weight.shape

    # NHWC internally: channels land on the lane dimension.
    x_nhwc = jnp.transpose(x, (0, 2, 3, 1))
    patches, oh, ow = _im2col_nhwc(x_nhwc, kh, kw, stride, padding)   # (M, K)
    m, k = patches.shape

    k_pad = _round_up(k, _LANE)
    cout_pad = _round_up(cout, _LANE)
    tm = _choose_tm(m, k_pad, cout_pad)
    m_pad = _round_up(m, tm)
    grid = (m_pad // tm,)

    patches_p = jnp.pad(patches.astype(jnp.bfloat16),
                        ((0, m_pad - m), (0, k_pad - k)))
    # (Cout, Cin, KH, KW) -> (KH, KW, Cin, Cout) -> (K, Cout); matches patch K order.
    w_mat = jnp.transpose(weight, (2, 3, 1, 0)).reshape(kh * kw * cin, cout)
    w_mat_p = jnp.pad(w_mat.astype(jnp.bfloat16),
                      ((0, k_pad - k), (0, cout_pad - cout)))

    cost1 = pl.CostEstimate(
        flops=2 * m_pad * k_pad * cout_pad,
        transcendentals=0,
        bytes_accessed=(m_pad * k_pad * 2 + k_pad * cout_pad * 2
                        + m_pad * cout_pad * 4))

    y_pad, sums, sqs = pl.pallas_call(
        _gemm_stats_kernel,
        out_shape=(jax.ShapeDtypeStruct((m_pad, cout_pad), jnp.float32),
                   jax.ShapeDtypeStruct((1, cout_pad), jnp.float32),
                   jax.ShapeDtypeStruct((1, cout_pad), jnp.float32)),
        grid_spec=pltpu.PrefetchScalarGridSpec(
            num_scalar_prefetch=0,
            grid=grid,
            in_specs=[pl.BlockSpec((tm, k_pad), lambda i: (i, 0)),
                      pl.BlockSpec((k_pad, cout_pad), lambda i: (0, 0))],
            out_specs=(pl.BlockSpec((tm, cout_pad), lambda i: (i, 0)),
                       pl.BlockSpec((1, cout_pad), lambda i: (0, 0)),
                       pl.BlockSpec((1, cout_pad), lambda i: (0, 0)))),
        compiler_params=pltpu.CompilerParams(
            # stats accumulation makes the M axis a sequential reduction here
            dimension_semantics=("arbitrary",),
            vmem_limit_bytes=48 * 1024 * 1024),
        cost_estimate=cost1,
    )(patches_p, w_mat_p)

    # Finalize BN stats (training mode: biased variance over all N*OH*OW rows;
    # zero-padded rows contribute nothing since we divide by the true M).
    count = jnp.asarray(m, jnp.float32)
    mean = sums[0] / count
    var = jnp.maximum(sqs[0] / count - mean * mean, 0.0)
    gamma_p = jnp.pad(gamma.astype(jnp.float32), (0, cout_pad - cout))
    beta_p = jnp.pad(beta.astype(jnp.float32), (0, cout_pad - cout))
    scale_1d = gamma_p * lax.rsqrt(var + BN_EPS)
    shift_1d = beta_p - mean * scale_1d
    scale_row = scale_1d.reshape(1, cout_pad)
    shift_row = shift_1d.reshape(1, cout_pad)

    cost2 = pl.CostEstimate(
        flops=2 * m_pad * cout_pad,
        transcendentals=0,
        bytes_accessed=2 * m_pad * cout_pad * 4)

    out_pad = pl.pallas_call(
        _bn_relu_kernel,
        out_shape=jax.ShapeDtypeStruct((m_pad, cout_pad), jnp.float32),
        grid_spec=pltpu.PrefetchScalarGridSpec(
            num_scalar_prefetch=0,
            grid=grid,
            in_specs=[pl.BlockSpec((tm, cout_pad), lambda i: (i, 0)),
                      pl.BlockSpec((1, cout_pad), lambda i: (0, 0)),
                      pl.BlockSpec((1, cout_pad), lambda i: (0, 0))],
            out_specs=pl.BlockSpec((tm, cout_pad), lambda i: (i, 0))),
        input_output_aliases={0: 0},          # normalize y in place
        compiler_params=pltpu.CompilerParams(
            dimension_semantics=("parallel",),
            vmem_limit_bytes=48 * 1024 * 1024),
        cost_estimate=cost2,
    )(y_pad, scale_row, shift_row)

    out = out_pad[:m, :cout].reshape(n, oh, ow, cout)
    return jnp.transpose(out, (0, 3, 1, 2))               # back to NCHW


def _reference(x, weight, bias, gamma, beta, *, stride=1, padding=0):
    y = lax.conv_general_dilated(
        x, weight, window_strides=(stride, stride),
        padding=((padding, padding), (padding, padding)),
        dimension_numbers=("NCHW", "OIHW", "NCHW"))
    y = y + bias.reshape(1, -1, 1, 1)
    mean = jnp.mean(y, axis=(0, 2, 3), keepdims=True)
    var = jnp.mean((y - mean) ** 2, axis=(0, 2, 3), keepdims=True)
    y = (y - mean) * lax.rsqrt(var + BN_EPS)
    y = y * gamma.reshape(1, -1, 1, 1) + beta.reshape(1, -1, 1, 1)
    return jnp.maximum(y, 0.0)


if __name__ == "__main__":
    # Conv2dModule(4, 8, 3, stride=1, padding=1, bias=True,
    #              activation='relu', norm='batch_norm')
    N, CIN, H, W = 2, 4, 16, 16
    COUT, KH, KW = 8, 3, 3
    STRIDE, PAD = 1, 1

    key = jax.random.PRNGKey(0)
    kx, kw_, kb = jax.random.split(key, 3)
    x = jax.random.normal(kx, (N, CIN, H, W), dtype=jnp.float32)

    fan_in = CIN * KH * KW
    bound = 1.0 / np.sqrt(fan_in)
    weight = jax.random.uniform(kw_, (COUT, CIN, KH, KW),
                                minval=-bound, maxval=bound, dtype=jnp.float32)
    bias = jax.random.uniform(kb, (COUT,), minval=-bound, maxval=bound,
                              dtype=jnp.float32)
    gamma = jnp.ones((COUT,), jnp.float32)   # BatchNorm2d default affine init
    beta = jnp.zeros((COUT,), jnp.float32)

    out = conv2d_module_forward(x, weight, bias, gamma, beta,
                                stride=STRIDE, padding=PAD)
    out = jax.block_until_ready(out)

    ref = _reference(x, weight, bias, gamma, beta, stride=STRIDE, padding=PAD)
    # Tolerance loosened vs the pure-f32 version: the GEMM inputs are bf16
    # (f32 accumulation); post-BN outputs are unit-scale so 2e-2 is ample.
    np.testing.assert_allclose(np.asarray(out), np.asarray(ref),
                               rtol=2e-2, atol=2e-2)
    print("KERNEL_OK")
</pallas_src>

<mosaic_0001>
module attributes {stable_mosaic.version = 11 : i64} {
  func.func @_bn_relu_kernel(%arg0: i32, %arg1: memref<512x128xf32, #tpu.memory_space<vmem>>, %arg2: memref<1x128xf32, #tpu.memory_space<vmem>>, %arg3: memref<1x128xf32, #tpu.memory_space<vmem>>, %arg4: memref<512x128xf32, #tpu.memory_space<vmem>>) attributes {dimension_semantics = [#tpu.dimension_semantics<parallel>], iteration_bounds = array<i64: 1>, scalar_prefetch = 0 : i64, scratch_operands = 0 : i64, tpu.core_type = #tpu.core_type<tc>, window_params = [{transform_indices = @transform_0, window_bounds = array<i64: 512, 128>}, {pipeline_mode = #tpu.pipeline_mode<synchronous>, transform_indices = @transform_1, window_bounds = array<i64: 1, 128>}, {pipeline_mode = #tpu.pipeline_mode<synchronous>, transform_indices = @transform_2, window_bounds = array<i64: 1, 128>}, {transform_indices = @transform_3, window_bounds = array<i64: 512, 128>}]} {
    %c0 = arith.constant 0 : index
    %c0_0 = arith.constant 0 : index
    %0 = vector.load %arg1[%c0, %c0_0] : memref<512x128xf32, #tpu.memory_space<vmem>>, vector<512x128xf32>
    %c0_1 = arith.constant 0 : index
    %c0_2 = arith.constant 0 : index
    %1 = vector.load %arg2[%c0_1, %c0_2] : memref<1x128xf32, #tpu.memory_space<vmem>>, vector<1x128xf32>
    %2 = vector.broadcast %1 : vector<1x128xf32> to vector<512x128xf32>
    %3 = arith.mulf %0, %2 : vector<512x128xf32>
    %c0_3 = arith.constant 0 : index
    %c0_4 = arith.constant 0 : index
    %4 = vector.load %arg3[%c0_3, %c0_4] : memref<1x128xf32, #tpu.memory_space<vmem>>, vector<1x128xf32>
    %5 = vector.broadcast %4 : vector<1x128xf32> to vector<512x128xf32>
    %6 = arith.addf %3, %5 : vector<512x128xf32>
    %cst = arith.constant 0.000000e+00 : f32
    %7 = vector.broadcast %cst : f32 to vector<512x128xf32>
    %8 = arith.maximumf %6, %7 : vector<512x128xf32>
    %c0_5 = arith.constant 0 : index
    %c0_6 = arith.constant 0 : index
    %9 = vector.load %arg4[%c0_5, %c0_6] : memref<512x128xf32, #tpu.memory_space<vmem>>, vector<512x128xf32>
    tpu.vector_store %arg4[%c0_5, %c0_6], %8 {strides = array<i32>} : memref<512x128xf32, #tpu.memory_space<vmem>>, vector<512x128xf32>,
    return
  }
  func.func @transform_0(%arg0: i32) -> (i32, i32) {
    %c0_i32 = arith.constant 0 : i32
    %c0_i32_0 = arith.constant 0 : i32
    return %arg0, %c0_i32 : i32, i32
  }
  func.func @transform_1(%arg0: i32) -> (i32, i32) {
    %c0_i32 = arith.constant 0 : i32
    %c0_i32_0 = arith.constant 0 : i32
    %c0_i32_1 = arith.constant 0 : i32
    return %c0_i32, %c0_i32_0 : i32, i32
  }
  func.func @transform_2(%arg0: i32) -> (i32, i32) {
    %c0_i32 = arith.constant 0 : i32
    %c0_i32_0 = arith.constant 0 : i32
    %c0_i32_1 = arith.constant 0 : i32
    return %c0_i32, %c0_i32_0 : i32, i32
  }
  func.func @transform_3(%arg0: i32) -> (i32, i32) {
    %c0_i32 = arith.constant 0 : i32
    %c0_i32_0 = arith.constant 0 : i32
    return %arg0, %c0_i32 : i32, i32
  }
}

module attributes {stable_mosaic.version = 11 : i64} {
  func.func @_gemm_stats_kernel(%arg0: i32, %arg1: memref<512x128xbf16, #tpu.memory_space<vmem>>, %arg2: memref<128x128xbf16, #tpu.memory_space<vmem>>, %arg3: memref<512x128xf32, #tpu.memory_space<vmem>>, %arg4: memref<1x128xf32, #tpu.memory_space<vmem>>, %arg5: memref<1x128xf32, #tpu.memory_space<vmem>>) attributes {dimension_semantics = [#tpu.dimension_semantics<arbitrary>], iteration_bounds = array<i64: 1>, scalar_prefetch = 0 : i64, scratch_operands = 0 : i64, tpu.core_type = #tpu.core_type<tc>, window_params = [{transform_indices = @transform_0, window_bounds = array<i64: 512, 128>}, {pipeline_mode = #tpu.pipeline_mode<synchronous>, transform_indices = @transform_1, window_bounds = array<i64: 128, 128>}, {transform_indices = @transform_2, window_bounds = array<i64: 512, 128>}, {pipeline_mode = #tpu.pipeline_mode<synchronous>, transform_indices = @transform_3, window_bounds = array<i64: 1, 128>}, {pipeline_mode = #tpu.pipeline_mode<synchronous>, transform_indices = @transform_4, window_bounds = array<i64: 1, 128>}]} {
    %c0 = arith.constant 0 : index
    %c0_0 = arith.constant 0 : index
    %0 = vector.load %arg1[%c0, %c0_0] : memref<512x128xbf16, #tpu.memory_space<vmem>>, vector<512x128xbf16>
    %c0_1 = arith.constant 0 : index
    %c0_2 = arith.constant 0 : index
    %1 = vector.load %arg2[%c0_1, %c0_2] : memref<128x128xbf16, #tpu.memory_space<vmem>>, vector<128x128xbf16>
    %cst = arith.constant dense<0.000000e+00> : vector<512x128xf32>
    %2 = tpu.matmul %0, %1, %cst {dimension_numbers = #tpu.dot_dimension_numbers<[1], [0], [0], [1], [0, 0, 1, 1], [], []>} : vector<512x128xbf16>, vector<128x128xbf16>, vector<512x128xf32> -> vector<512x128xf32>
    %c0_3 = arith.constant 0 : index
    %c0_4 = arith.constant 0 : index
    %3 = vector.load %arg3[%c0_3, %c0_4] : memref<512x128xf32, #tpu.memory_space<vmem>>, vector<512x128xf32>
    tpu.vector_store %arg3[%c0_3, %c0_4], %2 {strides = array<i32>} : memref<512x128xf32, #tpu.memory_space<vmem>>, vector<512x128xf32>,
    %c0_i32 = arith.constant 0 : i32
    %4 = arith.cmpi eq, %arg0, %c0_i32 : i32
    %5 = arith.extui %4 : i1 to i32
    %c0_i32_5 = arith.constant 0 : i32
    %6 = arith.cmpi ne, %5, %c0_i32_5 : i32
    scf.if %6 {
      %cst_16 = arith.constant 0.000000e+00 : f32
      %18 = vector.broadcast %cst_16 : f32 to vector<1x128xf32>
      %c0_17 = arith.constant 0 : index
      %c0_18 = arith.constant 0 : index
      %19 = vector.load %arg4[%c0_17, %c0_18] : memref<1x128xf32, #tpu.memory_space<vmem>>, vector<1x128xf32>
      tpu.vector_store %arg4[%c0_17, %c0_18], %18 {strides = array<i32>} : memref<1x128xf32, #tpu.memory_space<vmem>>, vector<1x128xf32>,
      %cst_19 = arith.constant 0.000000e+00 : f32
      %20 = vector.broadcast %cst_19 : f32 to vector<1x128xf32>
      %c0_20 = arith.constant 0 : index
      %c0_21 = arith.constant 0 : index
      %21 = vector.load %arg5[%c0_20, %c0_21] : memref<1x128xf32, #tpu.memory_space<vmem>>, vector<1x128xf32>
      tpu.vector_store %arg5[%c0_20, %c0_21], %20 {strides = array<i32>} : memref<1x128xf32, #tpu.memory_space<vmem>>, vector<1x128xf32>,
    } else {
    }
    %c0_6 = arith.constant 0 : index
    %c0_7 = arith.constant 0 : index
    %7 = vector.load %arg4[%c0_6, %c0_7] : memref<1x128xf32, #tpu.memory_space<vmem>>, vector<1x128xf32>
    %cst_8 = arith.constant dense<0.000000e+00> : vector<128xf32>
    %8 = vector.multi_reduction <add>, %2, %cst_8 [0] : vector<512x128xf32> to vector<128xf32>
    %9 = vector.shape_cast %8 : vector<128xf32> to vector<1x128xf32>
    %10 = arith.addf %7, %9 : vector<1x128xf32>
    %c0_9 = arith.constant 0 : index
    %c0_10 = arith.constant 0 : index
    %11 = vector.load %arg4[%c0_9, %c0_10] : memref<1x128xf32, #tpu.memory_space<vmem>>, vector<1x128xf32>
    tpu.vector_store %arg4[%c0_9, %c0_10], %10 {strides = array<i32>} : memref<1x128xf32, #tpu.memory_space<vmem>>, vector<1x128xf32>,
    %c0_11 = arith.constant 0 : index
    %c0_12 = arith.constant 0 : index
    %12 = vector.load %arg5[%c0_11, %c0_12] : memref<1x128xf32, #tpu.memory_space<vmem>>, vector<1x128xf32>
    %13 = arith.mulf %2, %2 : vector<512x128xf32>
    %cst_13 = arith.constant dense<0.000000e+00> : vector<128xf32>
    %14 = vector.multi_reduction <add>, %13, %cst_13 [0] : vector<512x128xf32> to vector<128xf32>
    %15 = vector.shape_cast %14 : vector<128xf32> to vector<1x128xf32>
    %16 = arith.addf %12, %15 : vector<1x128xf32>
    %c0_14 = arith.constant 0 : index
    %c0_15 = arith.constant 0 : index
    %17 = vector.load %arg5[%c0_14, %c0_15] : memref<1x128xf32, #tpu.memory_space<vmem>>, vector<1x128xf32>
    tpu.vector_store %arg5[%c0_14, %c0_15], %16 {strides = array<i32>} : memref<1x128xf32, #tpu.memory_space<vmem>>, vector<1x128xf32>,
    return
  }
  func.func @transform_0(%arg0: i32) -> (i32, i32) {
    %c0_i32 = arith.constant 0 : i32
    %c0_i32_0 = arith.constant 0 : i32
    return %arg0, %c0_i32 : i32, i32
  }
  func.func @transform_1(%arg0: i32) -> (i32, i32) {
    %c0_i32 = arith.constant 0 : i32
    %c0_i32_0 = arith.constant 0 : i32
    %c0_i32_1 = arith.constant 0 : i32
    return %c0_i32, %c0_i32_0 : i32, i32
  }
  func.func @transform_2(%arg0: i32) -> (i32, i32) {
    %c0_i32 = arith.constant 0 : i32
    %c0_i32_0 = arith.constant 0 : i32
    return %arg0, %c0_i32 : i32, i32
  }
  func.func @transform_3(%arg0: i32) -> (i32, i32) {
    %c0_i32 = arith.constant 0 : i32
    %c0_i32_0 = arith.constant 0 : i32
    %c0_i32_1 = arith.constant 0 : i32
    return %c0_i32, %c0_i32_0 : i32, i32
  }
  func.func @transform_4(%arg0: i32) -> (i32, i32) {
    %c0_i32 = arith.constant 0 : i32
    %c0_i32_0 = arith.constant 0 : i32
    %c0_i32_1 = arith.constant 0 : i32
    return %c0_i32, %c0_i32_0 : i32, i32
  }
}

</mosaic_0001>

<llo_original>
// kernel: conv2d_module_forward.3
$region0: #{conv2d_module_forward.3}
  #allocation0 [shape = 'u32[]', space=smem, size = 0x4, offset = 0x4, fixed_abs, tag = 'smem constant byte address 0x4 - core index']
  #allocation1 [shape = 'u32[144,128]{1,0:T(1,128)}', space=vmem, size = 0x12000, scoped, tag = 'internal scratch']
  %s0 = inlined_call_operand.vmem [shape: f32[512,128], index: 0, kind: input, shape index: {}, may-alias: {0,3}]
  %s1 = inlined_call_operand.vmem [shape: f32[1,128], index: 1, kind: input, shape index: {}]
  %s2 = inlined_call_operand.vmem [shape: f32[1,128], index: 2, kind: input, shape index: {}]
  %s3 = inlined_call_operand.vmem [shape: f32[512,128], index: 3, kind: output, shape index: {}, may-alias: {0,3}]
  %s4 = sld [smem:[#allocation0]]
  $region22: #{conv2d_module_forward.3} parent=0
    _
  %s6 = ssub.s32 1, %s4
  %s7 = scalar_select 0, %s6, %s4
  // Predicated region
  $region2: #{conv2d_module_forward.3} parent=0 // pred_check
    _
  $region3: #{conv2d_module_forward.3} parent=0 // pred_check_branch
    %9 = sbr.rel (0) target = $region5
  $region4: #{conv2d_module_forward.3} parent=0 // pred_region
    _
  $region5: #{conv2d_module_forward.3} parent=0 // pred_fallthru
    _
  // Predicated region
  $region6: #{conv2d_module_forward.3} parent=0 // pred_check
    _
  $region7: #{conv2d_module_forward.3} parent=0 // pred_check_branch
    %11 = sbr.rel (0) target = $region9
  $region8: #{conv2d_module_forward.3} parent=0 // pred_region
    _
  $region9: #{conv2d_module_forward.3} parent=0 // pred_fallthru
    _
  // Predicated region
  $region10: #{conv2d_module_forward.3} parent=0 // pred_check
    _
  $region11: #{conv2d_module_forward.3} parent=0 // pred_check_branch
    %13 = sbr.rel (0) target = $region13
  $region12: #{conv2d_module_forward.3} parent=0 // pred_region
    _
  $region13: #{conv2d_module_forward.3} parent=0 // pred_fallthru
    _
  %v14 = vld [vmem:[%s0] sm:$0xff]
  %v15 = vld [vmem:[%s0 + $0x8] sm:$0xff]
  %v16 = vld [vmem:[%s0 + $0x10] sm:$0xff]
  %v17 = vld [vmem:[%s0 + $0x18] sm:$0xff]
  %v18 = vld [vmem:[%s0 + $0x20] sm:$0xff]
  %v19 = vld [vmem:[%s0 + $0x28] sm:$0xff]
  %v20 = vld [vmem:[%s0 + $0x30] sm:$0xff]
  %v21 = vld [vmem:[%s0 + $0x38] sm:$0xff]
  %v22 = vld [vmem:[%s0 + $0x40] sm:$0xff]
  %v23 = vld [vmem:[%s0 + $0x48] sm:$0xff]
  %v24 = vld [vmem:[%s0 + $0x50] sm:$0xff]
  %v25 = vld [vmem:[%s0 + $0x58] sm:$0xff]
  %v26 = vld [vmem:[%s0 + $0x60] sm:$0xff]
  %v27 = vld [vmem:[%s0 + $0x68] sm:$0xff]
  %v28 = vld [vmem:[%s0 + $0x70] sm:$0xff]
  %v29 = vld [vmem:[%s0 + $0x78] sm:$0xff]
  %v30 = vld [vmem:[%s0 + $0x80] sm:$0xff]
  %v31 = vld [vmem:[%s0 + $0x88] sm:$0xff]
  %v32 = vld [vmem:[%s0 + $0x90] sm:$0xff]
  %v33 = vld [vmem:[%s0 + $0x98] sm:$0xff]
  %v34 = vld [vmem:[%s0 + $0xa0] sm:$0xff]
  %v35 = vld [vmem:[%s0 + $0xa8] sm:$0xff]
  %v36 = vld [vmem:[%s0 + $0xb0] sm:$0xff]
  %v37 = vld [vmem:[%s0 + $0xb8] sm:$0xff]
  %v38 = vld [vmem:[%s0 + $0xc0] sm:$0xff]
  %v39 = vld [vmem:[%s0 + $0xc8] sm:$0xff]
  %v40 = vld [vmem:[%s0 + $0xd0] sm:$0xff]
  %v41 = vld [vmem:[%s0 + $0xd8] sm:$0xff]
  %v42 = vld [vmem:[%s0 + $0xe0] sm:$0xff]
  %v43 = vld [vmem:[%s0 + $0xe8] sm:$0xff]
  %v44 = vld [vmem:[%s0 + $0xf0] sm:$0xff]
  %v45 = vld [vmem:[%s0 + $0xf8] sm:$0xff]
  %v46 = vld [vmem:[%s0 + $0x100] sm:$0xff]
  %v47 = vld [vmem:[%s0 + $0x108] sm:$0xff]
  %v48 = vld [vmem:[%s0 + $0x110] sm:$0xff]
  %v49 = vld [vmem:[%s0 + $0x118] sm:$0xff]
  %v50 = vld [vmem:[%s0 + $0x120] sm:$0xff]
  %v51 = vld [vmem:[%s0 + $0x128] sm:$0xff]
  %v52 = vld [vmem:[%s0 + $0x130] sm:$0xff]
  %v53 = vld [vmem:[%s0 + $0x138] sm:$0xff]
  %v54 = vld [vmem:[%s0 + $0x140] sm:$0xff]
  %v55 = vld [vmem:[%s0 + $0x148] sm:$0xff]
  %v56 = vld [vmem:[%s0 + $0x150] sm:$0xff]
  %v57 = vld [vmem:[%s0 + $0x158] sm:$0xff]
  %v58 = vld [vmem:[%s0 + $0x160] sm:$0xff]
  %v59 = vld [vmem:[%s0 + $0x168] sm:$0xff]
  %v60 = vld [vmem:[%s0 + $0x170] sm:$0xff]
  %v61 = vld [vmem:[%s0 + $0x178] sm:$0xff]
  %v62 = vld [vmem:[%s0 + $0x180] sm:$0xff]
  %v63 = vld [vmem:[%s0 + $0x188] sm:$0xff]
  %v64 = vld [vmem:[%s0 + $0x190] sm:$0xff]
  %v65 = vld [vmem:[%s0 + $0x198] sm:$0xff]
  %v66 = vld [vmem:[%s0 + $0x1a0] sm:$0xff]
  %v67 = vld [vmem:[%s0 + $0x1a8] sm:$0xff]
  %v68 = vld [vmem:[%s0 + $0x1b0] sm:$0xff]
  %v69 = vld [vmem:[%s0 + $0x1b8] sm:$0xff]
  %v70 = vld [vmem:[%s0 + $0x1c0] sm:$0xff]
  %v71 = vld [vmem:[%s0 + $0x1c8] sm:$0xff]
  %v72 = vld [vmem:[%s0 + $0x1d0] sm:$0xff]
  %v73 = vld [vmem:[%s0 + $0x1d8] sm:$0xff]
  %v74 = vld [vmem:[%s0 + $0x1e0] sm:$0xff]
  %v75 = vld [vmem:[%s0 + $0x1e8] sm:$0xff]
  %v76 = vld [vmem:[%s0 + $0x1f0] sm:$0xff]
  %v77 = vld [vmem:[%s0 + $0x1f8] sm:$0xff]
  %v78 = vld [vmem:[%s1] sm:$0x1]
  %v80 = vlaneseq
  %v81 = vshrl.u32 %v80, 7
  %v82 = vsub.s32 0, %v81
  %v83 = vrot.slane %v78, %v82
  %v85 = vmul.f32 %v14, %v83
  %v86 = vmul.f32 %v15, %v83
  %v87 = vmul.f32 %v16, %v83
  %v88 = vmul.f32 %v17, %v83
  %v89 = vmul.f32 %v18, %v83
  %v90 = vmul.f32 %v19, %v83
  %v91 = vmul.f32 %v20, %v83
  %v92 = vmul.f32 %v21, %v83
  %v93 = vmul.f32 %v22, %v83
  %v94 = vmul.f32 %v23, %v83
  %v95 = vmul.f32 %v24, %v83
  %v96 = vmul.f32 %v25, %v83
  %v97 = vmul.f32 %v26, %v83
  %v98 = vmul.f32 %v27, %v83
  %v99 = vmul.f32 %v28, %v83
  %v100 = vmul.f32 %v29, %v83
  %v101 = vmul.f32 %v30, %v83
  %v102 = vmul.f32 %v31, %v83
  %v103 = vmul.f32 %v32, %v83
  %v104 = vmul.f32 %v33, %v83
  %v105 = vmul.f32 %v34, %v83
  %v106 = vmul.f32 %v35, %v83
  %v107 = vmul.f32 %v36, %v83
  %v108 = vmul.f32 %v37, %v83
  %v109 = vmul.f32 %v38, %v83
  %v110 = vmul.f32 %v39, %v83
  %v111 = vmul.f32 %v40, %v83
  %v112 = vmul.f32 %v41, %v83
  %v113 = vmul.f32 %v42, %v83
  %v114 = vmul.f32 %v43, %v83
  %v115 = vmul.f32 %v44, %v83
  %v116 = vmul.f32 %v45, %v83
  %v117 = vmul.f32 %v46, %v83
  %v118 = vmul.f32 %v47, %v83
  %v119 = vmul.f32 %v48, %v83
  %v120 = vmul.f32 %v49, %v83
  %v121 = vmul.f32 %v50, %v83
  %v122 = vmul.f32 %v51, %v83
  %v123 = vmul.f32 %v52, %v83
  %v124 = vmul.f32 %v53, %v83
  %v125 = vmul.f32 %v54, %v83
  %v126 = vmul.f32 %v55, %v83
  %v127 = vmul.f32 %v56, %v83
  %v128 = vmul.f32 %v57, %v83
  %v129 = vmul.f32 %v58, %v83
  %v130 = vmul.f32 %v59, %v83
  %v131 = vmul.f32 %v60, %v83
  %v132 = vmul.f32 %v61, %v83
  %v133 = vmul.f32 %v62, %v83
  %v134 = vmul.f32 %v63, %v83
  %v135 = vmul.f32 %v64, %v83
  %v136 = vmul.f32 %v65, %v83
  %v137 = vmul.f32 %v66, %v83
  %v138 = vmul.f32 %v67, %v83
  %v139 = vmul.f32 %v68, %v83
  %v140 = vmul.f32 %v69, %v83
  %v141 = vmul.f32 %v70, %v83
  %v142 = vmul.f32 %v71, %v83
  %v143 = vmul.f32 %v72, %v83
  %v144 = vmul.f32 %v73, %v83
  %v145 = vmul.f32 %v74, %v83
  %v146 = vmul.f32 %v75, %v83
  %v147 = vmul.f32 %v76, %v83
  %v148 = vmul.f32 %v77, %v83
  %v149 = vld [vmem:[%s2] sm:$0x1]
  %v151 = vlaneseq
  %v152 = vshrl.u32 %v151, 7
  %v153 = vsub.s32 0, %v152
  %v154 = vrot.slane %v149, %v153
  %v156 = vadd.f32 %v85, %v154
  %v157 = vadd.f32 %v86, %v154
  %v158 = vadd.f32 %v87, %v154
  %v159 = vadd.f32 %v88, %v154
  %v160 = vadd.f32 %v89, %v154
  %v161 = vadd.f32 %v90, %v154
  %v162 = vadd.f32 %v91, %v154
  %v163 = vadd.f32 %v92, %v154
  %v164 = vadd.f32 %v93, %v154
  %v165 = vadd.f32 %v94, %v154
  %v166 = vadd.f32 %v95, %v154
  %v167 = vadd.f32 %v96, %v154
  %v168 = vadd.f32 %v97, %v154
  %v169 = vadd.f32 %v98, %v154
  %v170 = vadd.f32 %v99, %v154
  %v171 = vadd.f32 %v100, %v154
  %v172 = vadd.f32 %v101, %v154
  %v173 = vadd.f32 %v102, %v154
  %v174 = vadd.f32 %v103, %v154
  %v175 = vadd.f32 %v104, %v154
  %v176 = vadd.f32 %v105, %v154
  %v177 = vadd.f32 %v106, %v154
  %v178 = vadd.f32 %v107, %v154
  %v179 = vadd.f32 %v108, %v154
  %v180 = vadd.f32 %v109, %v154
  %v181 = vadd.f32 %v110, %v154
  %v182 = vadd.f32 %v111, %v154
  %v183 = vadd.f32 %v112, %v154
  %v184 = vadd.f32 %v113, %v154
  %v185 = vadd.f32 %v114, %v154
  %v186 = vadd.f32 %v115, %v154
  %v187 = vadd.f32 %v116, %v154
  %v188 = vadd.f32 %v117, %v154
  %v189 = vadd.f32 %v118, %v154
  %v190 = vadd.f32 %v119, %v154
  %v191 = vadd.f32 %v120, %v154
  %v192 = vadd.f32 %v121, %v154
  %v193 = vadd.f32 %v122, %v154
  %v194 = vadd.f32 %v123, %v154
  %v195 = vadd.f32 %v124, %v154
  %v196 = vadd.f32 %v125, %v154
  %v197 = vadd.f32 %v126, %v154
  %v198 = vadd.f32 %v127, %v154
  %v199 = vadd.f32 %v128, %v154
  %v200 = vadd.f32 %v129, %v154
  %v201 = vadd.f32 %v130, %v154
  %v202 = vadd.f32 %v131, %v154
  %v203 = vadd.f32 %v132, %v154
  %v204 = vadd.f32 %v133, %v154
  %v205 = vadd.f32 %v134, %v154
  %v206 = vadd.f32 %v135, %v154
  %v207 = vadd.f32 %v136, %v154
  %v208 = vadd.f32 %v137, %v154
  %v209 = vadd.f32 %v138, %v154
  %v210 = vadd.f32 %v139, %v154
  %v211 = vadd.f32 %v140, %v154
  %v212 = vadd.f32 %v141, %v154
  %v213 = vadd.f32 %v142, %v154
  %v214 = vadd.f32 %v143, %v154
  %v215 = vadd.f32 %v144, %v154
  %v216 = vadd.f32 %v145, %v154
  %v217 = vadd.f32 %v146, %v154
  %v218 = vadd.f32 %v147, %v154
  %v219 = vadd.f32 %v148, %v154
  %v220 = vmax.f32 %v156, 0.0
  %v221 = vmax.f32 %v157, 0.0
  %v222 = vmax.f32 %v158, 0.0
  %v223 = vmax.f32 %v159, 0.0
  %v224 = vmax.f32 %v160, 0.0
  %v225 = vmax.f32 %v161, 0.0
  %v226 = vmax.f32 %v162, 0.0
  %v227 = vmax.f32 %v163, 0.0
  %v228 = vmax.f32 %v164, 0.0
  %v229 = vmax.f32 %v165, 0.0
  %v230 = vmax.f32 %v166, 0.0
  %v231 = vmax.f32 %v167, 0.0
  %v232 = vmax.f32 %v168, 0.0
  %v233 = vmax.f32 %v169, 0.0
  %v234 = vmax.f32 %v170, 0.0
  %v235 = vmax.f32 %v171, 0.0
  %v236 = vmax.f32 %v172, 0.0
  %v237 = vmax.f32 %v173, 0.0
  %v238 = vmax.f32 %v174, 0.0
  %v239 = vmax.f32 %v175, 0.0
  %v240 = vmax.f32 %v176, 0.0
  %v241 = vmax.f32 %v177, 0.0
  %v242 = vmax.f32 %v178, 0.0
  %v243 = vmax.f32 %v179, 0.0
  %v244 = vmax.f32 %v180, 0.0
  %v245 = vmax.f32 %v181, 0.0
  %v246 = vmax.f32 %v182, 0.0
  %v247 = vmax.f32 %v183, 0.0
  %v248 = vmax.f32 %v184, 0.0
  %v249 = vmax.f32 %v185, 0.0
  %v250 = vmax.f32 %v186, 0.0
  %v251 = vmax.f32 %v187, 0.0
  %v252 = vmax.f32 %v188, 0.0
  %v253 = vmax.f32 %v189, 0.0
  %v254 = vmax.f32 %v190, 0.0
  %v255 = vmax.f32 %v191, 0.0
  %v256 = vmax.f32 %v192, 0.0
  %v257 = vmax.f32 %v193, 0.0
  %v258 = vmax.f32 %v194, 0.0
  %v259 = vmax.f32 %v195, 0.0
  %v260 = vmax.f32 %v196, 0.0
  %v261 = vmax.f32 %v197, 0.0
  %v262 = vmax.f32 %v198, 0.0
  %v263 = vmax.f32 %v199, 0.0
  %v264 = vmax.f32 %v200, 0.0
  %v265 = vmax.f32 %v201, 0.0
  %v266 = vmax.f32 %v202, 0.0
  %v267 = vmax.f32 %v203, 0.0
  %v268 = vmax.f32 %v204, 0.0
  %v269 = vmax.f32 %v205, 0.0
  %v270 = vmax.f32 %v206, 0.0
  %v271 = vmax.f32 %v207, 0.0
  %v272 = vmax.f32 %v208, 0.0
  %v273 = vmax.f32 %v209, 0.0
  %v274 = vmax.f32 %v210, 0.0
  %v275 = vmax.f32 %v211, 0.0
  %v276 = vmax.f32 %v212, 0.0
  %v277 = vmax.f32 %v213, 0.0
  %v278 = vmax.f32 %v214, 0.0
  %v279 = vmax.f32 %v215, 0.0
  %v280 = vmax.f32 %v216, 0.0
  %v281 = vmax.f32 %v217, 0.0
  %v282 = vmax.f32 %v218, 0.0
  %v283 = vmax.f32 %v219, 0.0
  %284 = vst [vmem:[%s3] sm:$0xff] %v220
  %285 = vst [vmem:[%s3 + $0x8] sm:$0xff] %v221
  %286 = vst [vmem:[%s3 + $0x10] sm:$0xff] %v222
  %287 = vst [vmem:[%s3 + $0x18] sm:$0xff] %v223
  %288 = vst [vmem:[%s3 + $0x20] sm:$0xff] %v224
  %289 = vst [vmem:[%s3 + $0x28] sm:$0xff] %v225
  %290 = vst [vmem:[%s3 + $0x30] sm:$0xff] %v226
  %291 = vst [vmem:[%s3 + $0x38] sm:$0xff] %v227
  %292 = vst [vmem:[%s3 + $0x40] sm:$0xff] %v228
  %293 = vst [vmem:[%s3 + $0x48] sm:$0xff] %v229
  %294 = vst [vmem:[%s3 + $0x50] sm:$0xff] %v230
  %295 = vst [vmem:[%s3 + $0x58] sm:$0xff] %v231
  %296 = vst [vmem:[%s3 + $0x60] sm:$0xff] %v232
  %297 = vst [vmem:[%s3 + $0x68] sm:$0xff] %v233
  %298 = vst [vmem:[%s3 + $0x70] sm:$0xff] %v234
  %299 = vst [vmem:[%s3 + $0x78] sm:$0xff] %v235
  %300 = vst [vmem:[%s3 + $0x80] sm:$0xff] %v236
  %301 = vst [vmem:[%s3 + $0x88] sm:$0xff] %v237
  %302 = vst [vmem:[%s3 + $0x90] sm:$0xff] %v238
  %303 = vst [vmem:[%s3 + $0x98] sm:$0xff] %v239
  %304 = vst [vmem:[%s3 + $0xa0] sm:$0xff] %v240
  %305 = vst [vmem:[%s3 + $0xa8] sm:$0xff] %v241
  %306 = vst [vmem:[%s3 + $0xb0] sm:$0xff] %v242
  %307 = vst [vmem:[%s3 + $0xb8] sm:$0xff] %v243
  %308 = vst [vmem:[%s3 + $0xc0] sm:$0xff] %v244
  %309 = vst [vmem:[%s3 + $0xc8] sm:$0xff] %v245
  %310 = vst [vmem:[%s3 + $0xd0] sm:$0xff] %v246
  %311 = vst [vmem:[%s3 + $0xd8] sm:$0xff] %v247
  %312 = vst [vmem:[%s3 + $0xe0] sm:$0xff] %v248
  %313 = vst [vmem:[%s3 + $0xe8] sm:$0xff] %v249
  %314 = vst [vmem:[%s3 + $0xf0] sm:$0xff] %v250
  %315 = vst [vmem:[%s3 + $0xf8] sm:$0xff] %v251
  %316 = vst [vmem:[%s3 + $0x100] sm:$0xff] %v252
  %317 = vst [vmem:[%s3 + $0x108] sm:$0xff] %v253
  %318 = vst [vmem:[%s3 + $0x110] sm:$0xff] %v254
  %319 = vst [vmem:[%s3 + $0x118] sm:$0xff] %v255
  %320 = vst [vmem:[%s3 + $0x120] sm:$0xff] %v256
  %321 = vst [vmem:[%s3 + $0x128] sm:$0xff] %v257
  %322 = vst [vmem:[%s3 + $0x130] sm:$0xff] %v258
  %323 = vst [vmem:[%s3 + $0x138] sm:$0xff] %v259
  %324 = vst [vmem:[%s3 + $0x140] sm:$0xff] %v260
  %325 = vst [vmem:[%s3 + $0x148] sm:$0xff] %v261
  %326 = vst [vmem:[%s3 + $0x150] sm:$0xff] %v262
  %327 = vst [vmem:[%s3 + $0x158] sm:$0xff] %v263
  %328 = vst [vmem:[%s3 + $0x160] sm:$0xff] %v264
  %329 = vst [vmem:[%s3 + $0x168] sm:$0xff] %v265
  %330 = vst [vmem:[%s3 + $0x170] sm:$0xff] %v266
  %331 = vst [vmem:[%s3 + $0x178] sm:$0xff] %v267
  %332 = vst [vmem:[%s3 + $0x180] sm:$0xff] %v268
  %333 = vst [vmem:[%s3 + $0x188] sm:$0xff] %v269
  %334 = vst [vmem:[%s3 + $0x190] sm:$0xff] %v270
  %335 = vst [vmem:[%s3 + $0x198] sm:$0xff] %v271
  %336 = vst [vmem:[%s3 + $0x1a0] sm:$0xff] %v272
  %337 = vst [vmem:[%s3 + $0x1a8] sm:$0xff] %v273
  %338 = vst [vmem:[%s3 + $0x1b0] sm:$0xff] %v274
  %339 = vst [vmem:[%s3 + $0x1b8] sm:$0xff] %v275
  %340 = vst [vmem:[%s3 + $0x1c0] sm:$0xff] %v276
  %341 = vst [vmem:[%s3 + $0x1c8] sm:$0xff] %v277
  %342 = vst [vmem:[%s3 + $0x1d0] sm:$0xff] %v278
  %343 = vst [vmem:[%s3 + $0x1d8] sm:$0xff] %v279
  %344 = vst [vmem:[%s3 + $0x1e0] sm:$0xff] %v280
  %345 = vst [vmem:[%s3 + $0x1e8] sm:$0xff] %v281
  %346 = vst [vmem:[%s3 + $0x1f0] sm:$0xff] %v282
  %347 = vst [vmem:[%s3 + $0x1f8] sm:$0xff] %v283
  // Predicated region
  $region14: #{conv2d_module_forward.3} parent=0 // pred_check
    _
  $region15: #{conv2d_module_forward.3} parent=0 // pred_check_branch
    %349 = sbr.rel (0) target = $region17
  $region16: #{conv2d_module_forward.3} parent=0 // pred_region
    _
  $region17: #{conv2d_module_forward.3} parent=0 // pred_fallthru
    _
  // Predicated region
  $region18: #{conv2d_module_forward.3} parent=0 // pred_check
    _
  $region19: #{conv2d_module_forward.3} parent=0 // pred_check_branch
    %351 = sbr.rel (0) target = $region21
  $region20: #{conv2d_module_forward.3} parent=0 // pred_region
    _
  $region21: #{conv2d_module_forward.3} parent=0 // pred_fallthru
    _

// kernel: conv2d_module_forward.2
$region0: #{conv2d_module_forward.2}
  #allocation0 [shape = 'u32[]', space=smem, size = 0x4, offset = 0x4, fixed_abs, tag = 'smem constant byte address 0x4 - core index']
  #allocation1 [shape = 'u32[144,128]{1,0:T(1,128)}', space=vmem, size = 0x12000, scoped, tag = 'internal scratch']
  %s0 = inlined_call_operand.vmem [shape: bf16[512,128], index: 0, kind: input, shape index: {}]
  %s1 = inlined_call_operand.vmem [shape: bf16[128,128], index: 1, kind: input, shape index: {}]
  %s2 = inlined_call_operand.vmem [shape: f32[512,128], index: 2, kind: output, shape index: {0}]
  %s3 = inlined_call_operand.vmem [shape: f32[1,128], index: 3, kind: output, shape index: {1}]
  %s4 = inlined_call_operand.vmem [shape: f32[1,128], index: 4, kind: output, shape index: {2}]
  %5 = xla_tuple %s2, %s3, %s4
  %s6 = sld [smem:[#allocation0]]
  $region38: #{conv2d_module_forward.2} parent=0
    _
  %s8 = ssub.s32 1, %s6
  %s9 = scalar_select 0, %s8, %s6
  // Predicated region
  $region2: #{conv2d_module_forward.2} parent=0 // pred_check
    _
  $region3: #{conv2d_module_forward.2} parent=0 // pred_check_branch
    %11 = sbr.rel (0) target = $region5
  $region4: #{conv2d_module_forward.2} parent=0 // pred_region
    _
  $region5: #{conv2d_module_forward.2} parent=0 // pred_fallthru
    _
  // Predicated region
  $region6: #{conv2d_module_forward.2} parent=0 // pred_check
    _
  $region7: #{conv2d_module_forward.2} parent=0 // pred_check_branch
    %13 = sbr.rel (0) target = $region9
  $region8: #{conv2d_module_forward.2} parent=0 // pred_region
    _
  $region9: #{conv2d_module_forward.2} parent=0 // pred_fallthru
    _
  %v15 = vld [vmem:[%s0] sm:$0xf]
  %v16 = vld [vmem:[%s0 + $0x4] sm:$0xf]
  %v17 = vld [vmem:[%s0 + $0x8] sm:$0xf]
  %v18 = vld [vmem:[%s0 + $0xc] sm:$0xf]
  %v19 = vld [vmem:[%s0 + $0x10] sm:$0xf]
  %v20 = vld [vmem:[%s0 + $0x14] sm:$0xf]
  %v21 = vld [vmem:[%s0 + $0x18] sm:$0xf]
  %v22 = vld [vmem:[%s0 + $0x1c] sm:$0xf]
  %v23 = vld [vmem:[%s0 + $0x20] sm:$0xf]
  %v24 = vld [vmem:[%s0 + $0x24] sm:$0xf]
  %v25 = vld [vmem:[%s0 + $0x28] sm:$0xf]
  %v26 = vld [vmem:[%s0 + $0x2c] sm:$0xf]
  %v27 = vld [vmem:[%s0 + $0x30] sm:$0xf]
  %v28 = vld [vmem:[%s0 + $0x34] sm:$0xf]
  %v29 = vld [vmem:[%s0 + $0x38] sm:$0xf]
  %v30 = vld [vmem:[%s0 + $0x3c] sm:$0xf]
  %v31 = vld [vmem:[%s0 + $0x40] sm:$0xf]
  %v32 = vld [vmem:[%s0 + $0x44] sm:$0xf]
  %v33 = vld [vmem:[%s0 + $0x48] sm:$0xf]
  %v34 = vld [vmem:[%s0 + $0x4c] sm:$0xf]
  %v35 = vld [vmem:[%s0 + $0x50] sm:$0xf]
  %v36 = vld [vmem:[%s0 + $0x54] sm:$0xf]
  %v37 = vld [vmem:[%s0 + $0x58] sm:$0xf]
  %v38 = vld [vmem:[%s0 + $0x5c] sm:$0xf]
  %v39 = vld [vmem:[%s0 + $0x60] sm:$0xf]
  %v40 = vld [vmem:[%s0 + $0x64] sm:$0xf]
  %v41 = vld [vmem:[%s0 + $0x68] sm:$0xf]
  %v42 = vld [vmem:[%s0 + $0x6c] sm:$0xf]
  %v43 = vld [vmem:[%s0 + $0x70] sm:$0xf]
  %v44 = vld [vmem:[%s0 + $0x74] sm:$0xf]
  %v45 = vld [vmem:[%s0 + $0x78] sm:$0xf]
  %v46 = vld [vmem:[%s0 + $0x7c] sm:$0xf]
  %v47 = vld [vmem:[%s0 + $0x80] sm:$0xf]
  %v48 = vld [vmem:[%s0 + $0x84] sm:$0xf]
  %v49 = vld [vmem:[%s0 + $0x88] sm:$0xf]
  %v50 = vld [vmem:[%s0 + $0x8c] sm:$0xf]
  %v51 = vld [vmem:[%s0 + $0x90] sm:$0xf]
  %v52 = vld [vmem:[%s0 + $0x94] sm:$0xf]
  %v53 = vld [vmem:[%s0 + $0x98] sm:$0xf]
  %v54 = vld [vmem:[%s0 + $0x9c] sm:$0xf]
  %v55 = vld [vmem:[%s0 + $0xa0] sm:$0xf]
  %v56 = vld [vmem:[%s0 + $0xa4] sm:$0xf]
  %v57 = vld [vmem:[%s0 + $0xa8] sm:$0xf]
  %v58 = vld [vmem:[%s0 + $0xac] sm:$0xf]
  %v59 = vld [vmem:[%s0 + $0xb0] sm:$0xf]
  %v60 = vld [vmem:[%s0 + $0xb4] sm:$0xf]
  %v61 = vld [vmem:[%s0 + $0xb8] sm:$0xf]
  %v62 = vld [vmem:[%s0 + $0xbc] sm:$0xf]
  %v63 = vld [vmem:[%s0 + $0xc0] sm:$0xf]
  %v64 = vld [vmem:[%s0 + $0xc4] sm:$0xf]
  %v65 = vld [vmem:[%s0 + $0xc8] sm:$0xf]
  %v66 = vld [vmem:[%s0 + $0xcc] sm:$0xf]
  %v67 = vld [vmem:[%s0 + $0xd0] sm:$0xf]
  %v68 = vld [vmem:[%s0 + $0xd4] sm:$0xf]
  %v69 = vld [vmem:[%s0 + $0xd8] sm:$0xf]
  %v70 = vld [vmem:[%s0 + $0xdc] sm:$0xf]
  %v71 = vld [vmem:[%s0 + $0xe0] sm:$0xf]
  %v72 = vld [vmem:[%s0 + $0xe4] sm:$0xf]
  %v73 = vld [vmem:[%s0 + $0xe8] sm:$0xf]
  %v74 = vld [vmem:[%s0 + $0xec] sm:$0xf]
  %v75 = vld [vmem:[%s0 + $0xf0] sm:$0xf]
  %v76 = vld [vmem:[%s0 + $0xf4] sm:$0xf]
  %v77 = vld [vmem:[%s0 + $0xf8] sm:$0xf]
  %v78 = vld [vmem:[%s0 + $0xfc] sm:$0xf]
  %v79 = vld [vmem:[%s1] sm:$0xf]
  %v80 = vld [vmem:[%s1 + $0x4] sm:$0xf]
  %v81 = vld [vmem:[%s1 + $0x8] sm:$0xf]
  %v82 = vld [vmem:[%s1 + $0xc] sm:$0xf]
  %v83 = vld [vmem:[%s1 + $0x10] sm:$0xf]
  %v84 = vld [vmem:[%s1 + $0x14] sm:$0xf]
  %v85 = vld [vmem:[%s1 + $0x18] sm:$0xf]
  %v86 = vld [vmem:[%s1 + $0x1c] sm:$0xf]
  %v87 = vld [vmem:[%s1 + $0x20] sm:$0xf]
  %v88 = vld [vmem:[%s1 + $0x24] sm:$0xf]
  %v89 = vld [vmem:[%s1 + $0x28] sm:$0xf]
  %v90 = vld [vmem:[%s1 + $0x2c] sm:$0xf]
  %v91 = vld [vmem:[%s1 + $0x30] sm:$0xf]
  %v92 = vld [vmem:[%s1 + $0x34] sm:$0xf]
  %v93 = vld [vmem:[%s1 + $0x38] sm:$0xf]
  %v94 = vld [vmem:[%s1 + $0x3c] sm:$0xf]
  %v159 = vunpack.c.l.b16 %v15
  %v160 = vunpack.c.l.b16 %v16
  %v161 = vunpack.c.l.b16 %v17
  %v162 = vunpack.c.l.b16 %v18
  %v163 = vunpack.c.l.b16 %v19
  %v164 = vunpack.c.l.b16 %v20
  %v165 = vunpack.c.l.b16 %v21
  %v166 = vunpack.c.l.b16 %v22
  %v167 = vunpack.c.l.b16 %v23
  %v168 = vunpack.c.l.b16 %v24
  %v169 = vunpack.c.l.b16 %v25
  %v170 = vunpack.c.l.b16 %v26
  %v171 = vunpack.c.l.b16 %v27
  %v172 = vunpack.c.l.b16 %v28
  %v173 = vunpack.c.l.b16 %v29
  %v174 = vunpack.c.l.b16 %v30
  %v175 = vunpack.c.l.b16 %v31
  %v176 = vunpack.c.l.b16 %v32
  %v177 = vunpack.c.l.b16 %v33
  %v178 = vunpack.c.l.b16 %v34
  %v179 = vunpack.c.l.b16 %v35
  %v180 = vunpack.c.l.b16 %v36
  %v181 = vunpack.c.l.b16 %v37
  %v182 = vunpack.c.l.b16 %v38
  %v183 = vunpack.c.l.b16 %v39
  %v184 = vunpack.c.l.b16 %v40
  %v185 = vunpack.c.l.b16 %v41
  %v186 = vunpack.c.l.b16 %v42
  %v187 = vunpack.c.l.b16 %v43
  %v188 = vunpack.c.l.b16 %v44
  %v189 = vunpack.c.l.b16 %v45
  %v190 = vunpack.c.l.b16 %v46
  %v191 = vunpack.c.l.b16 %v47
  %v192 = vunpack.c.l.b16 %v48
  %v193 = vunpack.c.l.b16 %v49
  %v194 = vunpack.c.l.b16 %v50
  %v195 = vunpack.c.l.b16 %v51
  %v196 = vunpack.c.l.b16 %v52
  %v197 = vunpack.c.l.b16 %v53
  %v198 = vunpack.c.l.b16 %v54
  %v199 = vunpack.c.l.b16 %v55
  %v200 = vunpack.c.l.b16 %v56
  %v201 = vunpack.c.l.b16 %v57
  %v202 = vunpack.c.l.b16 %v58
  %v203 = vunpack.c.l.b16 %v59
  %v204 = vunpack.c.l.b16 %v60
  %v205 = vunpack.c.l.b16 %v61
  %v206 = vunpack.c.l.b16 %v62
  %v207 = vunpack.c.l.b16 %v63
  %v208 = vunpack.c.l.b16 %v64
  %v209 = vunpack.c.l.b16 %v65
  %v210 = vunpack.c.l.b16 %v66
  %v211 = vunpack.c.l.b16 %v67
  %v212 = vunpack.c.l.b16 %v68
  %v213 = vunpack.c.l.b16 %v69
  %v214 = vunpack.c.l.b16 %v70
  %v215 = vunpack.c.l.b16 %v71
  %v216 = vunpack.c.l.b16 %v72
  %v217 = vunpack.c.l.b16 %v73
  %v218 = vunpack.c.l.b16 %v74
  %v219 = vunpack.c.l.b16 %v75
  %v220 = vunpack.c.l.b16 %v76
  %v221 = vunpack.c.l.b16 %v77
  %v222 = vunpack.c.l.b16 %v78
  %v223 = vpack.c.b16 %v160, %v159
  %v224 = vpack.c.b16 %v162, %v161
  %v225 = vpack.c.b16 %v164, %v163
  %v226 = vpack.c.b16 %v166, %v165
  %v227 = vpack.c.b16 %v168, %v167
  %v228 = vpack.c.b16 %v170, %v169
  %v229 = vpack.c.b16 %v172, %v171
  %v230 = vpack.c.b16 %v174, %v173
  %v231 = vpack.c.b16 %v176, %v175
  %v232 = vpack.c.b16 %v178, %v177
  %v233 = vpack.c.b16 %v180, %v179
  %v234 = vpack.c.b16 %v182, %v181
  %v235 = vpack.c.b16 %v184, %v183
  %v236 = vpack.c.b16 %v186, %v185
  %v237 = vpack.c.b16 %v188, %v187
  %v238 = vpack.c.b16 %v190, %v189
  %v239 = vpack.c.b16 %v192, %v191
  %v240 = vpack.c.b16 %v194, %v193
  %v241 = vpack.c.b16 %v196, %v195
  %v242 = vpack.c.b16 %v198, %v197
  %v243 = vpack.c.b16 %v200, %v199
  %v244 = vpack.c.b16 %v202, %v201
  %v245 = vpack.c.b16 %v204, %v203
  %v246 = vpack.c.b16 %v206, %v205
  %v247 = vpack.c.b16 %v208, %v207
  %v248 = vpack.c.b16 %v210, %v209
  %v249 = vpack.c.b16 %v212, %v211
  %v250 = vpack.c.b16 %v214, %v213
  %v251 = vpack.c.b16 %v216, %v215
  %v252 = vpack.c.b16 %v218, %v217
  %v253 = vpack.c.b16 %v220, %v219
  %v254 = vpack.c.b16 %v222, %v221
  %v303 = vunpack.c.l.b16 %v79
  %v304 = vunpack.c.l.b16 %v80
  %v305 = vunpack.c.l.b16 %v81
  %v306 = vunpack.c.l.b16 %v82
  %v307 = vunpack.c.l.b16 %v83
  %v308 = vunpack.c.l.b16 %v84
  %v309 = vunpack.c.l.b16 %v85
  %v310 = vunpack.c.l.b16 %v86
  %v311 = vunpack.c.l.b16 %v87
  %v312 = vunpack.c.l.b16 %v88
  %v313 = vunpack.c.l.b16 %v89
  %v314 = vunpack.c.l.b16 %v90
  %v315 = vunpack.c.l.b16 %v91
  %v316 = vunpack.c.l.b16 %v92
  %v317 = vunpack.c.l.b16 %v93
  %v318 = vunpack.c.l.b16 %v94
  %v319 = vpack.c.b16 %v304, %v303
  %v320 = vpack.c.b16 %v306, %v305
  %v321 = vpack.c.b16 %v308, %v307
  %v322 = vpack.c.b16 %v310, %v309
  %v323 = vpack.c.b16 %v312, %v311
  %v324 = vpack.c.b16 %v314, %v313
  %v325 = vpack.c.b16 %v316, %v315
  %v326 = vpack.c.b16 %v318, %v317
  %335 = vmatprep.subr.bf16.mxu0 0
  %336 = vmatpush1.bf16.msra.mxu0 %v319
  %337 = vmatprep.subr.bf16.mxu0 0
  %338 = vmatpush1.bf16.msra.mxu0 %v320
  %339 = vmatprep.subr.bf16.mxu0 0
  %340 = vmatpush1.bf16.msra.mxu0 %v321
  %341 = vmatprep.subr.bf16.mxu0 0
  %342 = vmatpush1.bf16.msra.mxu0 %v322
  %343 = vmatprep.subr.bf16.mxu0 0
  %344 = vmatpush1.bf16.msra.mxu0 %v323
  %345 = vmatprep.subr.bf16.mxu0 0
  %346 = vmatpush1.bf16.msra.mxu0 %v324
  %347 = vmatprep.subr.bf16.mxu0 0
  %348 = vmatpush1.bf16.msra.mxu0 %v325
  %349 = vmatprep.subr.bf16.mxu0 0
  %350 = vmatpush1.bf16.msra.mxu0 %v326
  %351 = vmatprep.subr.bf16.mxu0 0
  %352 = vmatpush1.bf16.msra.mxu0 0
  %353 = vmatprep.subr.bf16.mxu0 0
  %354 = vmatpush1.bf16.msra.mxu0 0
  %355 = vmatprep.subr.bf16.mxu0 0
  %356 = vmatpush1.bf16.msra.mxu0 0
  %357 = vmatprep.subr.bf16.mxu0 0
  %358 = vmatpush1.bf16.msra.mxu0 0
  %359 = vmatprep.subr.bf16.mxu0 0
  %360 = vmatpush1.bf16.msra.mxu0 0
  %361 = vmatprep.subr.bf16.mxu0 0
  %362 = vmatpush1.bf16.msra.mxu0 0
  %363 = vmatprep.subr.bf16.mxu0 0
  %364 = vmatpush1.bf16.msra.mxu0 0
  %365 = vmatprep.subr.bf16.mxu0 0
  %366 = vmatpush1.bf16.msra.mxu0 0
  %367 = vmatprep.mubr.bf16.mxu0 0
  %368 = vmatmul.mubr.bf16.gmra.mrb[0].mxu0 %v223
  %v369 = vpop.f32.mrb[0].mxu0
  %v370 = vadd.f32 0.0, %v369
  %v371 = vpop.f32.mrb[0].mxu0
  %v372 = vpop.f32.mrb[0].mxu0
  %v373 = vadd.f32 0.0, %v372
  %v374 = vpop.f32.mrb[0].mxu0
  %375 = vmatprep.mubr.bf16.mxu0 0
  %376 = vmatmul.mubr.bf16.gmra.mrb[0].mxu0 %v224
  %v377 = vpop.f32.mrb[0].mxu0
  %v378 = vadd.f32 0.0, %v377
  %v379 = vpop.f32.mrb[0].mxu0
  %v380 = vpop.f32.mrb[0].mxu0
  %v381 = vadd.f32 0.0, %v380
  %v382 = vpop.f32.mrb[0].mxu0
  %383 = vmatprep.mubr.bf16.mxu0 0
  %384 = vmatmul.mubr.bf16.gmra.mrb[0].mxu0 %v225
  %v385 = vpop.f32.mrb[0].mxu0
  %v386 = vadd.f32 0.0, %v385
  %v387 = vpop.f32.mrb[0].mxu0
  %v388 = vpop.f32.mrb[0].mxu0
  %v389 = vadd.f32 0.0, %v388
  %v390 = vpop.f32.mrb[0].mxu0
  %391 = vmatprep.mubr.bf16.mxu0 0
  %392 = vmatmul.mubr.bf16.gmra.mrb[0].mxu0 %v226
  %v393 = vpop.f32.mrb[0].mxu0
  %v394 = vadd.f32 0.0, %v393
  %v395 = vpop.f32.mrb[0].mxu0
  %v396 = vpop.f32.mrb[0].mxu0
  %v397 = vadd.f32 0.0, %v396
  %v398 = vpop.f32.mrb[0].mxu0
  %399 = vmatprep.mubr.bf16.mxu0 0
  %400 = vmatmul.mubr.bf16.gmra.mrb[0].mxu0 %v227
  %v401 = vpop.f32.mrb[0].mxu0
  %v402 = vadd.f32 0.0, %v401
  %v403 = vpop.f32.mrb[0].mxu0
  %v404 = vpop.f32.mrb[0].mxu0
  %v405 = vadd.f32 0.0, %v404
  %v406 = vpop.f32.mrb[0].mxu0
  %407 = vmatprep.mubr.bf16.mxu0 0
  %408 = vmatmul.mubr.bf16.gmra.mrb[0].mxu0 %v228
  %v409 = vpop.f32.mrb[0].mxu0
  %v410 = vadd.f32 0.0, %v409
  %v411 = vpop.f32.mrb[0].mxu0
  %v412 = vpop.f32.mrb[0].mxu0
  %v413 = vadd.f32 0.0, %v412
  %v414 = vpop.f32.mrb[0].mxu0
  %415 = vmatprep.mubr.bf16.mxu0 0
  %416 = vmatmul.mubr.bf16.gmra.mrb[0].mxu0 %v229
  %v417 = vpop.f32.mrb[0].mxu0
  %v418 = vadd.f32 0.0, %v417
  %v419 = vpop.f32.mrb[0].mxu0
  %v420 = vpop.f32.mrb[0].mxu0
  %v421 = vadd.f32 0.0, %v420
  %v422 = vpop.f32.mrb[0].mxu0
  %423 = vmatprep.mubr.bf16.mxu0 0
  %424 = vmatmul.mubr.bf16.gmra.mrb[0].mxu0 %v230
  %v425 = vpop.f32.mrb[0].mxu0
  %v426 = vadd.f32 0.0, %v425
  %v427 = vpop.f32.mrb[0].mxu0
  %v428 = vpop.f32.mrb[0].mxu0
  %v429 = vadd.f32 0.0, %v428
  %v430 = vpop.f32.mrb[0].mxu0
  %431 = vmatprep.mubr.bf16.mxu0 0
  %432 = vmatmul.mubr.bf16.gmra.mrb[0].mxu0 %v231
  %v433 = vpop.f32.mrb[0].mxu0
  %v434 = vadd.f32 0.0, %v433
  %v435 = vpop.f32.mrb[0].mxu0
  %v436 = vpop.f32.mrb[0].mxu0
  %v437 = vadd.f32 0.0, %v436
  %v438 = vpop.f32.mrb[0].mxu0
  %439 = vmatprep.mubr.bf16.mxu0 0
  %440 = vmatmul.mubr.bf16.gmra.mrb[0].mxu0 %v232
  %v441 = vpop.f32.mrb[0].mxu0
  %v442 = vadd.f32 0.0, %v441
  %v443 = vpop.f32.mrb[0].mxu0
  %v444 = vpop.f32.mrb[0].mxu0
  %v445 = vadd.f32 0.0, %v444
  %v446 = vpop.f32.mrb[0].mxu0
  %447 = vmatprep.mubr.bf16.mxu0 0
  %448 = vmatmul.mubr.bf16.gmra.mrb[0].mxu0 %v233
  %v449 = vpop.f32.mrb[0].mxu0
  %v450 = vadd.f32 0.0, %v449
  %v451 = vpop.f32.mrb[0].mxu0
  %v452 = vpop.f32.mrb[0].mxu0
  %v453 = vadd.f32 0.0, %v452
  %v454 = vpop.f32.mrb[0].mxu0
  %455 = vmatprep.mubr.bf16.mxu0 0
  %456 = vmatmul.mubr.bf16.gmra.mrb[0].mxu0 %v234
  %v457 = vpop.f32.mrb[0].mxu0
  %v458 = vadd.f32 0.0, %v457
  %v459 = vpop.f32.mrb[0].mxu0
  %v460 = vpop.f32.mrb[0].mxu0
  %v461 = vadd.f32 0.0, %v460
  %v462 = vpop.f32.mrb[0].mxu0
  %463 = vmatprep.mubr.bf16.mxu0 0
  %464 = vmatmul.mubr.bf16.gmra.mrb[0].mxu0 %v235
  %v465 = vpop.f32.mrb[0].mxu0
  %v466 = vadd.f32 0.0, %v465
  %v467 = vpop.f32.mrb[0].mxu0
  %v468 = vpop.f32.mrb[0].mxu0
  %v469 = vadd.f32 0.0, %v468
  %v470 = vpop.f32.mrb[0].mxu0
  %471 = vmatprep.mubr.bf16.mxu0 0
  %472 = vmatmul.mubr.bf16.gmra.mrb[0].mxu0 %v236
  %v473 = vpop.f32.mrb[0].mxu0
  %v474 = vadd.f32 0.0, %v473
  %v475 = vpop.f32.mrb[0].mxu0
  %v476 = vpop.f32.mrb[0].mxu0
  %v477 = vadd.f32 0.0, %v476
  %v478 = vpop.f32.mrb[0].mxu0
  %479 = vmatprep.mubr.bf16.mxu0 0
  %480 = vmatmul.mubr.bf16.gmra.mrb[0].mxu0 %v237
  %v481 = vpop.f32.mrb[0].mxu0
  %v482 = vadd.f32 0.0, %v481
  %v483 = vpop.f32.mrb[0].mxu0
  %v484 = vpop.f32.mrb[0].mxu0
  %v485 = vadd.f32 0.0, %v484
  %v486 = vpop.f32.mrb[0].mxu0
  %487 = vmatprep.mubr.bf16.mxu0 0
  %488 = vmatmul.mubr.bf16.gmra.mrb[0].mxu0 %v238
  %v489 = vpop.f32.mrb[0].mxu0
  %v490 = vadd.f32 0.0, %v489
  %v491 = vpop.f32.mrb[0].mxu0
  %v492 = vpop.f32.mrb[0].mxu0
  %v493 = vadd.f32 0.0, %v492
  %v494 = vpop.f32.mrb[0].mxu0
  %495 = vmatprep.mubr.bf16.mxu0 0
  %496 = vmatmul.mubr.bf16.gmra.mrb[0].mxu0 %v239
  %v497 = vpop.f32.mrb[0].mxu0
  %v498 = vadd.f32 0.0, %v497
  %v499 = vpop.f32.mrb[0].mxu0
  %v500 = vpop.f32.mrb[0].mxu0
  %v501 = vadd.f32 0.0, %v500
  %v502 = vpop.f32.mrb[0].mxu0
  %503 = vmatprep.mubr.bf16.mxu0 0
  %504 = vmatmul.mubr.bf16.gmra.mrb[0].mxu0 %v240
  %v505 = vpop.f32.mrb[0].mxu0
  %v506 = vadd.f32 0.0, %v505
  %v507 = vpop.f32.mrb[0].mxu0
  %v508 = vpop.f32.mrb[0].mxu0
  %v509 = vadd.f32 0.0, %v508
  %v510 = vpop.f32.mrb[0].mxu0
  %511 = vmatprep.mubr.bf16.mxu0 0
  %512 = vmatmul.mubr.bf16.gmra.mrb[0].mxu0 %v241
  %v513 = vpop.f32.mrb[0].mxu0
  %v514 = vadd.f32 0.0, %v513
  %v515 = vpop.f32.mrb[0].mxu0
  %v516 = vpop.f32.mrb[0].mxu0
  %v517 = vadd.f32 0.0, %v516
  %v518 = vpop.f32.mrb[0].mxu0
  %519 = vmatprep.mubr.bf16.mxu0 0
  %520 = vmatmul.mubr.bf16.gmra.mrb[0].mxu0 %v242
  %v521 = vpop.f32.mrb[0].mxu0
  %v522 = vadd.f32 0.0, %v521
  %v523 = vpop.f32.mrb[0].mxu0
  %v524 = vpop.f32.mrb[0].mxu0
  %v525 = vadd.f32 0.0, %v524
  %v526 = vpop.f32.mrb[0].mxu0
  %527 = vmatprep.mubr.bf16.mxu0 0
  %528 = vmatmul.mubr.bf16.gmra.mrb[0].mxu0 %v243
  %v529 = vpop.f32.mrb[0].mxu0
  %v530 = vadd.f32 0.0, %v529
  %v531 = vpop.f32.mrb[0].mxu0
  %v532 = vpop.f32.mrb[0].mxu0
  %v533 = vadd.f32 0.0, %v532
  %v534 = vpop.f32.mrb[0].mxu0
  %535 = vmatprep.mubr.bf16.mxu0 0
  %536 = vmatmul.mubr.bf16.gmra.mrb[0].mxu0 %v244
  %v537 = vpop.f32.mrb[0].mxu0
  %v538 = vadd.f32 0.0, %v537
  %v539 = vpop.f32.mrb[0].mxu0
  %v540 = vpop.f32.mrb[0].mxu0
  %v541 = vadd.f32 0.0, %v540
  %v542 = vpop.f32.mrb[0].mxu0
  %543 = vmatprep.mubr.bf16.mxu0 0
  %544 = vmatmul.mubr.bf16.gmra.mrb[0].mxu0 %v245
  %v545 = vpop.f32.mrb[0].mxu0
  %v546 = vadd.f32 0.0, %v545
  %v547 = vpop.f32.mrb[0].mxu0
  %v548 = vpop.f32.mrb[0].mxu0
  %v549 = vadd.f32 0.0, %v548
  %v550 = vpop.f32.mrb[0].mxu0
  %551 = vmatprep.mubr.bf16.mxu0 0
  %552 = vmatmul.mubr.bf16.gmra.mrb[0].mxu0 %v246
  %v553 = vpop.f32.mrb[0].mxu0
  %v554 = vadd.f32 0.0, %v553
  %v555 = vpop.f32.mrb[0].mxu0
  %v556 = vpop.f32.mrb[0].mxu0
  %v557 = vadd.f32 0.0, %v556
  %v558 = vpop.f32.mrb[0].mxu0
  %559 = vmatprep.mubr.bf16.mxu0 0
  %560 = vmatmul.mubr.bf16.gmra.mrb[0].mxu0 %v247
  %v561 = vpop.f32.mrb[0].mxu0
  %v562 = vadd.f32 0.0, %v561
  %v563 = vpop.f32.mrb[0].mxu0
  %v564 = vpop.f32.mrb[0].mxu0
  %v565 = vadd.f32 0.0, %v564
  %v566 = vpop.f32.mrb[0].mxu0
  %567 = vmatprep.mubr.bf16.mxu0 0
  %568 = vmatmul.mubr.bf16.gmra.mrb[0].mxu0 %v248
  %v569 = vpop.f32.mrb[0].mxu0
  %v570 = vadd.f32 0.0, %v569
  %v571 = vpop.f32.mrb[0].mxu0
  %v572 = vpop.f32.mrb[0].mxu0
  %v573 = vadd.f32 0.0, %v572
  %v574 = vpop.f32.mrb[0].mxu0
  %575 = vmatprep.mubr.bf16.mxu0 0
  %576 = vmatmul.mubr.bf16.gmra.mrb[0].mxu0 %v249
  %v577 = vpop.f32.mrb[0].mxu0
  %v578 = vadd.f32 0.0, %v577
  %v579 = vpop.f32.mrb[0].mxu0
  %v580 = vpop.f32.mrb[0].mxu0
  %v581 = vadd.f32 0.0, %v580
  %v582 = vpop.f32.mrb[0].mxu0
  %583 = vmatprep.mubr.bf16.mxu0 0
  %584 = vmatmul.mubr.bf16.gmra.mrb[0].mxu0 %v250
  %v585 = vpop.f32.mrb[0].mxu0
  %v586 = vadd.f32 0.0, %v585
  %v587 = vpop.f32.mrb[0].mxu0
  %v588 = vpop.f32.mrb[0].mxu0
  %v589 = vadd.f32 0.0, %v588
  %v590 = vpop.f32.mrb[0].mxu0
  %591 = vmatprep.mubr.bf16.mxu0 0
  %592 = vmatmul.mubr.bf16.gmra.mrb[0].mxu0 %v251
  %v593 = vpop.f32.mrb[0].mxu0
  %v594 = vadd.f32 0.0, %v593
  %v595 = vpop.f32.mrb[0].mxu0
  %v596 = vpop.f32.mrb[0].mxu0
  %v597 = vadd.f32 0.0, %v596
  %v598 = vpop.f32.mrb[0].mxu0
  %599 = vmatprep.mubr.bf16.mxu0 0
  %600 = vmatmul.mubr.bf16.gmra.mrb[0].mxu0 %v252
  %v601 = vpop.f32.mrb[0].mxu0
  %v602 = vadd.f32 0.0, %v601
  %v603 = vpop.f32.mrb[0].mxu0
  %v604 = vpop.f32.mrb[0].mxu0
  %v605 = vadd.f32 0.0, %v604
  %v606 = vpop.f32.mrb[0].mxu0
  %607 = vmatprep.mubr.bf16.mxu0 0
  %608 = vmatmul.mubr.bf16.gmra.mrb[0].mxu0 %v253
  %v609 = vpop.f32.mrb[0].mxu0
  %v610 = vadd.f32 0.0, %v609
  %v611 = vpop.f32.mrb[0].mxu0
  %v612 = vpop.f32.mrb[0].mxu0
  %v613 = vadd.f32 0.0, %v612
  %v614 = vpop.f32.mrb[0].mxu0
  %615 = vmatprep.mubr.bf16.mxu0 0
  %616 = vmatmul.mubr.bf16.gmra.mrb[0].mxu0 %v254
  %v617 = vpop.f32.mrb[0].mxu0
  %v618 = vadd.f32 0.0, %v617
  %v619 = vpop.f32.mrb[0].mxu0
  %v620 = vpop.f32.mrb[0].mxu0
  %v621 = vadd.f32 0.0, %v620
  %v622 = vpop.f32.mrb[0].mxu0
  %623 = vdwg.mxu0
  %624 = vst [vmem:[%s2] sm:$0xff] %v370
  %625 = vst [vmem:[%s2 + $0x8] sm:$0xff] %v373
  %626 = vst [vmem:[%s2 + $0x10] sm:$0xff] %v378
  %627 = vst [vmem:[%s2 + $0x18] sm:$0xff] %v381
  %628 = vst [vmem:[%s2 + $0x20] sm:$0xff] %v386
  %629 = vst [vmem:[%s2 + $0x28] sm:$0xff] %v389
  %630 = vst [vmem:[%s2 + $0x30] sm:$0xff] %v394
  %631 = vst [vmem:[%s2 + $0x38] sm:$0xff] %v397
  %632 = vst [vmem:[%s2 + $0x40] sm:$0xff] %v402
  %633 = vst [vmem:[%s2 + $0x48] sm:$0xff] %v405
  %634 = vst [vmem:[%s2 + $0x50] sm:$0xff] %v410
  %635 = vst [vmem:[%s2 + $0x58] sm:$0xff] %v413
  %636 = vst [vmem:[%s2 + $0x60] sm:$0xff] %v418
  %637 = vst [vmem:[%s2 + $0x68] sm:$0xff] %v421
  %638 = vst [vmem:[%s2 + $0x70] sm:$0xff] %v426
  %639 = vst [vmem:[%s2 + $0x78] sm:$0xff] %v429
  %640 = vst [vmem:[%s2 + $0x80] sm:$0xff] %v434
  %641 = vst [vmem:[%s2 + $0x88] sm:$0xff] %v437
  %642 = vst [vmem:[%s2 + $0x90] sm:$0xff] %v442
  %643 = vst [vmem:[%s2 + $0x98] sm:$0xff] %v445
  %644 = vst [vmem:[%s2 + $0xa0] sm:$0xff] %v450
  %645 = vst [vmem:[%s2 + $0xa8] sm:$0xff] %v453
  %646 = vst [vmem:[%s2 + $0xb0] sm:$0xff] %v458
  %647 = vst [vmem:[%s2 + $0xb8] sm:$0xff] %v461
  %648 = vst [vmem:[%s2 + $0xc0] sm:$0xff] %v466
  %649 = vst [vmem:[%s2 + $0xc8] sm:$0xff] %v469
  %650 = vst [vmem:[%s2 + $0xd0] sm:$0xff] %v474
  %651 = vst [vmem:[%s2 + $0xd8] sm:$0xff] %v477
  %652 = vst [vmem:[%s2 + $0xe0] sm:$0xff] %v482
  %653 = vst [vmem:[%s2 + $0xe8] sm:$0xff] %v485
  %654 = vst [vmem:[%s2 + $0xf0] sm:$0xff] %v490
  %655 = vst [vmem:[%s2 + $0xf8] sm:$0xff] %v493
  %656 = vst [vmem:[%s2 + $0x100] sm:$0xff] %v498
  %657 = vst [vmem:[%s2 + $0x108] sm:$0xff] %v501
  %658 = vst [vmem:[%s2 + $0x110] sm:$0xff] %v506
  %659 = vst [vmem:[%s2 + $0x118] sm:$0xff] %v509
  %660 = vst [vmem:[%s2 + $0x120] sm:$0xff] %v514
  %661 = vst [vmem:[%s2 + $0x128] sm:$0xff] %v517
  %662 = vst [vmem:[%s2 + $0x130] sm:$0xff] %v522
  %663 = vst [vmem:[%s2 + $0x138] sm:$0xff] %v525
  %664 = vst [vmem:[%s2 + $0x140] sm:$0xff] %v530
  %665 = vst [vmem:[%s2 + $0x148] sm:$0xff] %v533
  %666 = vst [vmem:[%s2 + $0x150] sm:$0xff] %v538
  %667 = vst [vmem:[%s2 + $0x158] sm:$0xff] %v541
  %668 = vst [vmem:[%s2 + $0x160] sm:$0xff] %v546
  %669 = vst [vmem:[%s2 + $0x168] sm:$0xff] %v549
  %670 = vst [vmem:[%s2 + $0x170] sm:$0xff] %v554
  %671 = vst [vmem:[%s2 + $0x178] sm:$0xff] %v557
  %672 = vst [vmem:[%s2 + $0x180] sm:$0xff] %v562
  %673 = vst [vmem:[%s2 + $0x188] sm:$0xff] %v565
  %674 = vst [vmem:[%s2 + $0x190] sm:$0xff] %v570
  %675 = vst [vmem:[%s2 + $0x198] sm:$0xff] %v573
  %676 = vst [vmem:[%s2 + $0x1a0] sm:$0xff] %v578
  %677 = vst [vmem:[%s2 + $0x1a8] sm:$0xff] %v581
  %678 = vst [vmem:[%s2 + $0x1b0] sm:$0xff] %v586
  %679 = vst [vmem:[%s2 + $0x1b8] sm:$0xff] %v589
  %680 = vst [vmem:[%s2 + $0x1c0] sm:$0xff] %v594
  %681 = vst [vmem:[%s2 + $0x1c8] sm:$0xff] %v597
  %682 = vst [vmem:[%s2 + $0x1d0] sm:$0xff] %v602
  %683 = vst [vmem:[%s2 + $0x1d8] sm:$0xff] %v605
  %684 = vst [vmem:[%s2 + $0x1e0] sm:$0xff] %v610
  %685 = vst [vmem:[%s2 + $0x1e8] sm:$0xff] %v613
  %686 = vst [vmem:[%s2 + $0x1f0] sm:$0xff] %v618
  %687 = vst [vmem:[%s2 + $0x1f8] sm:$0xff] %v621
  %p688 = scmp.eq.s32.totalorder 0, 0
  // Predicated region
  $region10: #{conv2d_module_forward.2} parent=0 // pred_check
    %p689 = pneg %p688
  $region11: #{conv2d_module_forward.2} parent=0 // pred_check_branch
    %691 = sbr.rel (%p689) target = $region13
  $region12: #{conv2d_module_forward.2} parent=0 // pred_region
    %692 = vst [vmem:[%s3] sm:$0x1] 0.0
    %693 = vst [vmem:[%s4] sm:$0x1] 0.0
  $region13: #{conv2d_module_forward.2} parent=0 // pred_fallthru
    _
  %v694 = vld [vmem:[%s3] sm:$0x1]
  %v695 = vadd.f32 %v370, %v373
  %v696 = vadd.f32 %v695, %v378
  %v697 = vadd.f32 %v696, %v381
  %v698 = vadd.f32 %v697, %v386
  %v699 = vadd.f32 %v698, %v389
  %v700 = vadd.f32 %v699, %v394
  %v701 = vadd.f32 %v700, %v397
  %v702 = vadd.f32 %v701, %v402
  %v703 = vadd.f32 %v702, %v405
  %v704 = vadd.f32 %v703, %v410
  %v705 = vadd.f32 %v704, %v413
  %v706 = vadd.f32 %v705, %v418
  %v707 = vadd.f32 %v706, %v421
  %v708 = vadd.f32 %v707, %v426
  %v709 = vadd.f32 %v708, %v429
  %v710 = vadd.f32 %v709, %v434
  %v711 = vadd.f32 %v710, %v437
  %v712 = vadd.f32 %v711, %v442
  %v713 = vadd.f32 %v712, %v445
  %v714 = vadd.f32 %v713, %v450
  %v715 = vadd.f32 %v714, %v453
  %v716 = vadd.f32 %v715, %v458
  %v717 = vadd.f32 %v716, %v461
  %v718 = vadd.f32 %v717, %v466
  %v719 = vadd.f32 %v718, %v469
  %v720 = vadd.f32 %v719, %v474
  %v721 = vadd.f32 %v720, %v477
  %v722 = vadd.f32 %v721, %v482
  %v723 = vadd.f32 %v722, %v485
  %v724 = vadd.f32 %v723, %v490
  %v725 = vadd.f32 %v724, %v493
  %v726 = vadd.f32 %v725, %v498
  %v727 = vadd.f32 %v726, %v501
  %v728 = vadd.f32 %v727, %v506
  %v729 = vadd.f32 %v728, %v509
  %v730 = vadd.f32 %v729, %v514
  %v731 = vadd.f32 %v730, %v517
  %v732 = vadd.f32 %v731, %v522
  %v733 = vadd.f32 %v732, %v525
  %v734 = vadd.f32 %v733, %v530
  %v735 = vadd.f32 %v734, %v533
  %v736 = vadd.f32 %v735, %v538
  %v737 = vadd.f32 %v736, %v541
  %v738 = vadd.f32 %v737, %v546
  %v739 = vadd.f32 %v738, %v549
  %v740 = vadd.f32 %v739, %v554
  %v741 = vadd.f32 %v740, %v557
  %v742 = vadd.f32 %v741, %v562
  %v743 = vadd.f32 %v742, %v565
  %v744 = vadd.f32 %v743, %v570
  %v745 = vadd.f32 %v744, %v573
  %v746 = vadd.f32 %v745, %v578
  %v747 = vadd.f32 %v746, %v581
  %v748 = vadd.f32 %v747, %v586
  %v749 = vadd.f32 %v748, %v589
  %v750 = vadd.f32 %v749, %v594
  %v751 = vadd.f32 %v750, %v597
  %v752 = vadd.f32 %v751, %v602
  %v753 = vadd.f32 %v752, %v605
  %v754 = vadd.f32 %v753, %v610
  %v755 = vadd.f32 %v754, %v613
  %v756 = vadd.f32 %v755, %v618
  %v757 = vadd.f32 %v756, %v621
  %v758 = vrot.slane %v757, 4
  %v759 = vadd.f32 %v757, %v758
  %v760 = vrot.slane %v759, 2
  %v761 = vadd.f32 %v759, %v760
  %v762 = vrot.slane %v761, 1
  %v763 = vadd.f32 %v761, %v762
  %v764 = vadd.f32 %v694, %v763
  %765 = vst [vmem:[%s3] sm:$0x1] %v764
  %v766 = vld [vmem:[%s4] sm:$0x1]
  %v767 = vmul.f32 %v370, %v370
  %v768 = vmul.f32 %v373, %v373
  %v769 = vmul.f32 %v378, %v378
  %v770 = vmul.f32 %v381, %v381
  %v771 = vmul.f32 %v386, %v386
  %v772 = vmul.f32 %v389, %v389
  %v773 = vmul.f32 %v394, %v394
  %v774 = vmul.f32 %v397, %v397
  %v775 = vmul.f32 %v402, %v402
  %v776 = vmul.f32 %v405, %v405
  %v777 = vmul.f32 %v410, %v410
  %v778 = vmul.f32 %v413, %v413
  %v779 = vmul.f32 %v418, %v418
  %v780 = vmul.f32 %v421, %v421
  %v781 = vmul.f32 %v426, %v426
  %v782 = vmul.f32 %v429, %v429
  %v783 = vmul.f32 %v434, %v434
  %v784 = vmul.f32 %v437, %v437
  %v785 = vmul.f32 %v442, %v442
  %v786 = vmul.f32 %v445, %v445
  %v787 = vmul.f32 %v450, %v450
  %v788 = vmul.f32 %v453, %v453
  %v789 = vmul.f32 %v458, %v458
  %v790 = vmul.f32 %v461, %v461
  %v791 = vmul.f32 %v466, %v466
  %v792 = vmul.f32 %v469, %v469
  %v793 = vmul.f32 %v474, %v474
  %v794 = vmul.f32 %v477, %v477
  %v795 = vmul.f32 %v482, %v482
  %v796 = vmul.f32 %v485, %v485
  %v797 = vmul.f32 %v490, %v490
  %v798 = vmul.f32 %v493, %v493
  %v799 = vmul.f32 %v498, %v498
  %v800 = vmul.f32 %v501, %v501
  %v801 = vmul.f32 %v506, %v506
  %v802 = vmul.f32 %v509, %v509
  %v803 = vmul.f32 %v514, %v514
  %v804 = vmul.f32 %v517, %v517
  %v805 = vmul.f32 %v522, %v522
  %v806 = vmul.f32 %v525, %v525
  %v807 = vmul.f32 %v530, %v530
  %v808 = vmul.f32 %v533, %v533
  %v809 = vmul.f32 %v538, %v538
  %v810 = vmul.f32 %v541, %v541
  %v811 = vmul.f32 %v546, %v546
  %v812 = vmul.f32 %v549, %v549
  %v813 = vmul.f32 %v554, %v554
  %v814 = vmul.f32 %v557, %v557
  %v815 = vmul.f32 %v562, %v562
  %v816 = vmul.f32 %v565, %v565
  %v817 = vmul.f32 %v570, %v570
  %v818 = vmul.f32 %v573, %v573
  %v819 = vmul.f32 %v578, %v578
  %v820 = vmul.f32 %v581, %v581
  %v821 = vmul.f32 %v586, %v586
  %v822 = vmul.f32 %v589, %v589
  %v823 = vmul.f32 %v594, %v594
  %v824 = vmul.f32 %v597, %v597
  %v825 = vmul.f32 %v602, %v602
  %v826 = vmul.f32 %v605, %v605
  %v827 = vmul.f32 %v610, %v610
  %v828 = vmul.f32 %v613, %v613
  %v829 = vmul.f32 %v618, %v618
  %v830 = vmul.f32 %v621, %v621
  %v831 = vadd.f32 %v767, %v768
  %v832 = vadd.f32 %v831, %v769
  %v833 = vadd.f32 %v832, %v770
  %v834 = vadd.f32 %v833, %v771
  %v835 = vadd.f32 %v834, %v772
  %v836 = vadd.f32 %v835, %v773
  %v837 = vadd.f32 %v836, %v774
  %v838 = vadd.f32 %v837, %v775
  %v839 = vadd.f32 %v838, %v776
  %v840 = vadd.f32 %v839, %v777
  %v841 = vadd.f32 %v840, %v778
  %v842 = vadd.f32 %v841, %v779
  %v843 = vadd.f32 %v842, %v780
  %v844 = vadd.f32 %v843, %v781
  %v845 = vadd.f32 %v844, %v782
  %v846 = vadd.f32 %v845, %v783
  %v847 = vadd.f32 %v846, %v784
  %v848 = vadd.f32 %v847, %v785
  %v849 = vadd.f32 %v848, %v786
  %v850 = vadd.f32 %v849, %v787
  %v851 = vadd.f32 %v850, %v788
  %v852 = vadd.f32 %v851, %v789
  %v853 = vadd.f32 %v852, %v790
  %v854 = vadd.f32 %v853, %v791
  %v855 = vadd.f32 %v854, %v792
  %v856 = vadd.f32 %v855, %v793
  %v857 = vadd.f32 %v856, %v794
  %v858 = vadd.f32 %v857, %v795
  %v859 = vadd.f32 %v858, %v796
  %v860 = vadd.f32 %v859, %v797
  %v861 = vadd.f32 %v860, %v798
  %v862 = vadd.f32 %v861, %v799
  %v863 = vadd.f32 %v862, %v800
  %v864 = vadd.f32 %v863, %v801
  %v865 = vadd.f32 %v864, %v802
  %v866 = vadd.f32 %v865, %v803
  %v867 = vadd.f32 %v866, %v804
  %v868 = vadd.f32 %v867, %v805
  %v869 = vadd.f32 %v868, %v806
  %v870 = vadd.f32 %v869, %v807
  %v871 = vadd.f32 %v870, %v808
  %v872 = vadd.f32 %v871, %v809
  %v873 = vadd.f32 %v872, %v810
  %v874 = vadd.f32 %v873, %v811
  %v875 = vadd.f32 %v874, %v812
  %v876 = vadd.f32 %v875, %v813
  %v877 = vadd.f32 %v876, %v814
  %v878 = vadd.f32 %v877, %v815
  %v879 = vadd.f32 %v878, %v816
  %v880 = vadd.f32 %v879, %v817
  %v881 = vadd.f32 %v880, %v818
  %v882 = vadd.f32 %v881, %v819
  %v883 = vadd.f32 %v882, %v820
  %v884 = vadd.f32 %v883, %v821
  %v885 = vadd.f32 %v884, %v822
  %v886 = vadd.f32 %v885, %v823
  %v887 = vadd.f32 %v886, %v824
  %v888 = vadd.f32 %v887, %v825
  %v889 = vadd.f32 %v888, %v826
  %v890 = vadd.f32 %v889, %v827
  %v891 = vadd.f32 %v890, %v828
  %v892 = vadd.f32 %v891, %v829
  %v893 = vadd.f32 %v892, %v830
  %v894 = vrot.slane %v893, 4
  %v895 = vadd.f32 %v893, %v894
  %v896 = vrot.slane %v895, 2
  %v897 = vadd.f32 %v895, %v896
  %v898 = vrot.slane %v897, 1
  %v899 = vadd.f32 %v897, %v898
  %v900 = vadd.f32 %v766, %v899
  %901 = vst [vmem:[%s4] sm:$0x1] %v900
  // Predicated region
  $region14: #{conv2d_module_forward.2} parent=0 // pred_check
    _
  $region15: #{conv2d_module_forward.2} parent=0 // pred_check_branch
    %903 = sbr.rel (0) target = $region17
  $region16: #{conv2d_module_forward.2} parent=0 // pred_region
    _
  $region17: #{conv2d_module_forward.2} parent=0 // pred_fallthru
    _
  // Predicated region
  $region18: #{conv2d_module_forward.2} parent=0 // pred_check
    _
  $region19: #{conv2d_module_forward.2} parent=0 // pred_check_branch
    %905 = sbr.rel (0) target = $region21
  $region20: #{conv2d_module_forward.2} parent=0 // pred_region
    _
  $region21: #{conv2d_module_forward.2} parent=0 // pred_fallthru
    _
  // Predicated region
  $region22: #{conv2d_module_forward.2} parent=0 // pred_check
    _
  $region23: #{conv2d_module_forward.2} parent=0 // pred_check_branch
    %907 = sbr.rel (0) target = $region25
  $region24: #{conv2d_module_forward.2} parent=0 // pred_region
    _
  $region25: #{conv2d_module_forward.2} parent=0 // pred_fallthru
    _
  // Predicated region
  $region26: #{conv2d_module_forward.2} parent=0 // pred_check
    _
  $region27: #{conv2d_module_forward.2} parent=0 // pred_check_branch
    %909 = sbr.rel (0) target = $region29
  $region28: #{conv2d_module_forward.2} parent=0 // pred_region
    _
  $region29: #{conv2d_module_forward.2} parent=0 // pred_fallthru
    _
  // Predicated region
  $region30: #{conv2d_module_forward.2} parent=0 // pred_check
    _
  $region31: #{conv2d_module_forward.2} parent=0 // pred_check_branch
    %911 = sbr.rel (0) target = $region33
  $region32: #{conv2d_module_forward.2} parent=0 // pred_region
    _
  $region33: #{conv2d_module_forward.2} parent=0 // pred_fallthru
    _
  // Predicated region
  $region34: #{conv2d_module_forward.2} parent=0 // pred_check
    _
  $region35: #{conv2d_module_forward.2} parent=0 // pred_check_branch
    %913 = sbr.rel (0) target = $region37
  $region36: #{conv2d_module_forward.2} parent=0 // pred_region
    _
  $region37: #{conv2d_module_forward.2} parent=0 // pred_fallthru
    _

</llo_original>
